<compile_context>
chip_gen: v5e
topology: v5e:2x2
jax: 0.10.0
libtpu: 0.0.40
codegen_flags: <defaults>
</compile_context>

<pallas_src>
import functools

import jax
import jax.numpy as jnp
from jax import lax
from jax.experimental import pallas as pl
from jax.experimental.pallas import tpu as pltpu


def _round_up(x, m):
    return ((x + m - 1) // m) * m


def _conv_branch2_kernel(x_ref, w_ref, p_ref, m_ref, o_ref, *,
                         ksize, wp, inv_hw, eps, slope):
    # x_ref: (1, C_in, lin) bf16    w_ref: (K*K, C_out, C_in) bf16
    # p_ref: (C_out, 2) f32 [gamma|beta]   m_ref: (1, hwo) f32 validity mask
    # o_ref: (1, C_out, hwo) f32
    x = x_ref[0]                                   # (C_in, lin)
    c_out = o_ref.shape[1]
    hwo = o_ref.shape[2]

    # Convolution: accumulate K*K tap matmuls on the MXU (f32 accumulator).
    acc = jnp.zeros((c_out, hwo), jnp.float32)
    for kh in range(ksize):
        for kw in range(ksize):
            t = kh * ksize + kw
            off = kh * wp + kw                     # static flat offset
            tap = x[:, off:off + hwo]              # (C_in, hwo)
            acc = acc + jnp.dot(w_ref[t], tap,
                                preferred_element_type=jnp.float32)

    # InstanceNorm2d stats over valid spatial positions only (biased variance).
    mask = m_ref[...]                              # (1, hwo)
    accm = acc * mask
    mean = jnp.sum(accm, axis=-1, keepdims=True) * inv_hw          # (C_out, 1)
    var = jnp.sum(accm * acc, axis=-1, keepdims=True) * inv_hw - mean * mean

    # Fold the affine into the normalization.
    params = p_ref[...]                            # (C_out, 2)
    gamma = params[:, 0:1]
    beta = params[:, 1:2]
    scale = gamma * lax.rsqrt(var + eps)           # (C_out, 1)
    shift = beta - mean * scale
    y = acc * scale + shift

    # LeakyReLU(0.2)
    o_ref[0] = jnp.where(y >= 0, y, slope * y).astype(o_ref.dtype)


def conv_branch2(x, conv_w, conv_b, gamma, beta, *, kernel_size,
                 eps=1e-5, slope=0.2):
    N, C_in, H, W = x.shape
    C_out = conv_w.shape[0]
    K = kernel_size
    p = (K - 1) // 2
    Hp, Wp = H + 2 * p, W + 2 * p

    # Output computed over the flattened (H, Wp) grid, padded to lane-dense 128.
    hwo = _round_up(H * Wp, 128)
    # Flat input length so every tap read (max offset (K-1)*(Wp+1)) is in-bounds.
    lin = _round_up(hwo + (K - 1) * (Wp + 1), 128)

    # Same-pad + flatten spatial; zero tail keeps tap reads in-bounds. bf16 feed.
    xp = jnp.pad(x, ((0, 0), (0, 0), (p, p), (p, p)))
    x_flat = jnp.pad(xp.reshape(N, C_in, Hp * Wp),
                     ((0, 0), (0, 0), (0, lin - Hp * Wp))).astype(jnp.bfloat16)

    # Tap-major weights: (K, K, C_out, C_in) -> (K*K, C_out, C_in), bf16.
    w_taps = jnp.transpose(conv_w, (2, 3, 0, 1)).reshape(
        K * K, C_out, C_in).astype(jnp.bfloat16)
    # Conv bias is intentionally unused: it cancels exactly under InstanceNorm.
    del conv_b
    params = jnp.stack([gamma, beta], axis=1).astype(jnp.float32)   # (C_out, 2)

    # Validity mask over the flattened (H, Wp) output positions.
    pos = jnp.arange(hwo)
    valid = (pos < H * Wp) & ((pos % Wp) < W)
    mask = valid.astype(jnp.float32)[None, :]                       # (1, hwo)

    kernel = functools.partial(_conv_branch2_kernel, ksize=K, wp=Wp,
                               inv_hw=1.0 / float(H * W), eps=eps, slope=slope)

    out_flat = pl.pallas_call(
        kernel,
        out_shape=jax.ShapeDtypeStruct((N, C_out, hwo), x.dtype),
        grid_spec=pltpu.PrefetchScalarGridSpec(
            num_scalar_prefetch=0,
            grid=(N,),
            in_specs=[
                pl.BlockSpec((1, C_in, lin), lambda n: (n, 0, 0)),
                pl.BlockSpec((K * K, C_out, C_in), lambda n: (0, 0, 0)),
                pl.BlockSpec((C_out, 2), lambda n: (0, 0)),
                pl.BlockSpec((1, hwo), lambda n: (0, 0)),
            ],
            out_specs=pl.BlockSpec((1, C_out, hwo), lambda n: (n, 0, 0)),
        ),
        compiler_params=pltpu.CompilerParams(dimension_semantics=("parallel",)),
    )(x_flat, w_taps, params, mask)

    # Crop the right-edge garbage columns and the lane-pad tail.
    out = out_flat[:, :, :H * Wp].reshape(N, C_out, H, Wp)[:, :, :, :W]
    return out


def _reference(x, conv_w, conv_b, gamma, beta, *, kernel_size, eps=1e-5, slope=0.2):
    p = (kernel_size - 1) // 2
    y = lax.conv_general_dilated(
        x, conv_w, window_strides=(1, 1), padding=[(p, p), (p, p)],
        dimension_numbers=("NCHW", "OIHW", "NCHW"))
    y = y + conv_b[None, :, None, None]
    m = jnp.mean(y, axis=(2, 3), keepdims=True)
    v = jnp.mean(jnp.square(y - m), axis=(2, 3), keepdims=True)
    yn = (y - m) / jnp.sqrt(v + eps)
    ya = gamma[None, :, None, None] * yn + beta[None, :, None, None]
    return jnp.where(ya >= 0, ya, slope * ya)


if __name__ == "__main__":
    N, C_in, C_out, H, W, K = 2, 4, 8, 16, 16, 3
    key = jax.random.PRNGKey(0)
    kx, kw, kb, kg, kbe = jax.random.split(key, 5)
    # deterministic synthetic parameters (shapes from ConvBranch2.__init__)
    x = jax.random.normal(kx, (N, C_in, H, W), jnp.float32)
    conv_w = 0.1 * jax.random.normal(kw, (C_out, C_in, K, K), jnp.float32)
    conv_b = 0.05 * jax.random.normal(kb, (C_out,), jnp.float32)
    gamma = 1.0 + 0.1 * jax.random.normal(kg, (C_out,), jnp.float32)
    beta = 0.1 * jax.random.normal(kbe, (C_out,), jnp.float32)

    out = conv_branch2(x, conv_w, conv_b, gamma, beta, kernel_size=K)
    out = jax.block_until_ready(out)

    ref = _reference(x, conv_w, conv_b, gamma, beta, kernel_size=K)
    assert out.shape == (N, C_out, H, W)
    # bf16 matmul inputs (f32 accumulate + f32 norm) -> loosened tolerance.
    err = float(jnp.max(jnp.abs(out - ref)))
    assert err < 5e-2, f"max abs err {err}"
    print("KERNEL_OK")
</pallas_src>

<mosaic_0001>
module attributes {stable_mosaic.version = 11 : i64} {
  func.func @_conv_branch2_kernel(%arg0: i32, %arg1: memref<1x4x512xbf16, #tpu.memory_space<vmem>>, %arg2: memref<9x8x4xbf16, #tpu.memory_space<vmem>>, %arg3: memref<8x2xf32, #tpu.memory_space<vmem>>, %arg4: memref<1x384xf32, #tpu.memory_space<vmem>>, %arg5: memref<1x8x384xf32, #tpu.memory_space<vmem>>) attributes {dimension_semantics = [#tpu.dimension_semantics<parallel>], iteration_bounds = array<i64: 2>, scalar_prefetch = 0 : i64, scratch_operands = 0 : i64, tpu.core_type = #tpu.core_type<tc>, window_params = [{transform_indices = @transform_0, window_bounds = array<i64: 1, 4, 512>}, {pipeline_mode = #tpu.pipeline_mode<synchronous>, transform_indices = @transform_1, window_bounds = array<i64: 9, 8, 4>}, {pipeline_mode = #tpu.pipeline_mode<synchronous>, transform_indices = @transform_2, window_bounds = array<i64: 8, 2>}, {pipeline_mode = #tpu.pipeline_mode<synchronous>, transform_indices = @transform_3, window_bounds = array<i64: 1, 384>}, {transform_indices = @transform_4, window_bounds = array<i64: 1, 8, 384>}]} {
    %c0 = arith.constant 0 : index
    %c0_0 = arith.constant 0 : index
    %c0_1 = arith.constant 0 : index
    %0 = vector.load %arg1[%c0, %c0_0, %c0_1] : memref<1x4x512xbf16, #tpu.memory_space<vmem>>, vector<1x4x512xbf16>
    %1 = vector.shape_cast %0 : vector<1x4x512xbf16> to vector<4x512xbf16>
    %cst = arith.constant 0.000000e+00 : f32
    %2 = vector.broadcast %cst : f32 to vector<8x384xf32>
    %3 = vector.extract_strided_slice %1 {offsets = [0, 0], sizes = [4, 384], strides = [1, 1]} : vector<4x512xbf16> to vector<4x384xbf16>
    %c0_2 = arith.constant 0 : index
    %c0_3 = arith.constant 0 : index
    %c0_4 = arith.constant 0 : index
    %4 = vector.load %arg2[%c0_2, %c0_3, %c0_4] : memref<9x8x4xbf16, #tpu.memory_space<vmem>>, vector<1x8x4xbf16>
    %5 = vector.shape_cast %4 : vector<1x8x4xbf16> to vector<8x4xbf16>
    %cst_5 = arith.constant dense<0.000000e+00> : vector<8x384xf32>
    %6 = tpu.matmul %5, %3, %cst_5 {dimension_numbers = #tpu.dot_dimension_numbers<[1], [0], [0], [1], [0, 0, 1, 1], [], []>} : vector<8x4xbf16>, vector<4x384xbf16>, vector<8x384xf32> -> vector<8x384xf32>
    %7 = arith.addf %2, %6 : vector<8x384xf32>
    %8 = vector.extract_strided_slice %1 {offsets = [0, 1], sizes = [4, 384], strides = [1, 1]} : vector<4x512xbf16> to vector<4x384xbf16>
    %c1 = arith.constant 1 : index
    %c0_6 = arith.constant 0 : index
    %c0_7 = arith.constant 0 : index
    %9 = vector.load %arg2[%c1, %c0_6, %c0_7] : memref<9x8x4xbf16, #tpu.memory_space<vmem>>, vector<1x8x4xbf16>
    %10 = vector.shape_cast %9 : vector<1x8x4xbf16> to vector<8x4xbf16>
    %cst_8 = arith.constant dense<0.000000e+00> : vector<8x384xf32>
    %11 = tpu.matmul %10, %8, %cst_8 {dimension_numbers = #tpu.dot_dimension_numbers<[1], [0], [0], [1], [0, 0, 1, 1], [], []>} : vector<8x4xbf16>, vector<4x384xbf16>, vector<8x384xf32> -> vector<8x384xf32>
    %12 = arith.addf %7, %11 : vector<8x384xf32>
    %13 = vector.extract_strided_slice %1 {offsets = [0, 2], sizes = [4, 384], strides = [1, 1]} : vector<4x512xbf16> to vector<4x384xbf16>
    %c2 = arith.constant 2 : index
    %c0_9 = arith.constant 0 : index
    %c0_10 = arith.constant 0 : index
    %14 = vector.load %arg2[%c2, %c0_9, %c0_10] : memref<9x8x4xbf16, #tpu.memory_space<vmem>>, vector<1x8x4xbf16>
    %15 = vector.shape_cast %14 : vector<1x8x4xbf16> to vector<8x4xbf16>
    %cst_11 = arith.constant dense<0.000000e+00> : vector<8x384xf32>
    %16 = tpu.matmul %15, %13, %cst_11 {dimension_numbers = #tpu.dot_dimension_numbers<[1], [0], [0], [1], [0, 0, 1, 1], [], []>} : vector<8x4xbf16>, vector<4x384xbf16>, vector<8x384xf32> -> vector<8x384xf32>
    %17 = arith.addf %12, %16 : vector<8x384xf32>
    %18 = vector.extract_strided_slice %1 {offsets = [0, 18], sizes = [4, 384], strides = [1, 1]} : vector<4x512xbf16> to vector<4x384xbf16>
    %c3 = arith.constant 3 : index
    %c0_12 = arith.constant 0 : index
    %c0_13 = arith.constant 0 : index
    %19 = vector.load %arg2[%c3, %c0_12, %c0_13] : memref<9x8x4xbf16, #tpu.memory_space<vmem>>, vector<1x8x4xbf16>
    %20 = vector.shape_cast %19 : vector<1x8x4xbf16> to vector<8x4xbf16>
    %cst_14 = arith.constant dense<0.000000e+00> : vector<8x384xf32>
    %21 = tpu.matmul %20, %18, %cst_14 {dimension_numbers = #tpu.dot_dimension_numbers<[1], [0], [0], [1], [0, 0, 1, 1], [], []>} : vector<8x4xbf16>, vector<4x384xbf16>, vector<8x384xf32> -> vector<8x384xf32>
    %22 = arith.addf %17, %21 : vector<8x384xf32>
    %23 = vector.extract_strided_slice %1 {offsets = [0, 19], sizes = [4, 384], strides = [1, 1]} : vector<4x512xbf16> to vector<4x384xbf16>
    %c4 = arith.constant 4 : index
    %c0_15 = arith.constant 0 : index
    %c0_16 = arith.constant 0 : index
    %24 = vector.load %arg2[%c4, %c0_15, %c0_16] : memref<9x8x4xbf16, #tpu.memory_space<vmem>>, vector<1x8x4xbf16>
    %25 = vector.shape_cast %24 : vector<1x8x4xbf16> to vector<8x4xbf16>
    %cst_17 = arith.constant dense<0.000000e+00> : vector<8x384xf32>
    %26 = tpu.matmul %25, %23, %cst_17 {dimension_numbers = #tpu.dot_dimension_numbers<[1], [0], [0], [1], [0, 0, 1, 1], [], []>} : vector<8x4xbf16>, vector<4x384xbf16>, vector<8x384xf32> -> vector<8x384xf32>
    %27 = arith.addf %22, %26 : vector<8x384xf32>
    %28 = vector.extract_strided_slice %1 {offsets = [0, 20], sizes = [4, 384], strides = [1, 1]} : vector<4x512xbf16> to vector<4x384xbf16>
    %c5 = arith.constant 5 : index
    %c0_18 = arith.constant 0 : index
    %c0_19 = arith.constant 0 : index
    %29 = vector.load %arg2[%c5, %c0_18, %c0_19] : memref<9x8x4xbf16, #tpu.memory_space<vmem>>, vector<1x8x4xbf16>
    %30 = vector.shape_cast %29 : vector<1x8x4xbf16> to vector<8x4xbf16>
    %cst_20 = arith.constant dense<0.000000e+00> : vector<8x384xf32>
    %31 = tpu.matmul %30, %28, %cst_20 {dimension_numbers = #tpu.dot_dimension_numbers<[1], [0], [0], [1], [0, 0, 1, 1], [], []>} : vector<8x4xbf16>, vector<4x384xbf16>, vector<8x384xf32> -> vector<8x384xf32>
    %32 = arith.addf %27, %31 : vector<8x384xf32>
    %33 = vector.extract_strided_slice %1 {offsets = [0, 36], sizes = [4, 384], strides = [1, 1]} : vector<4x512xbf16> to vector<4x384xbf16>
    %c6 = arith.constant 6 : index
    %c0_21 = arith.constant 0 : index
    %c0_22 = arith.constant 0 : index
    %34 = vector.load %arg2[%c6, %c0_21, %c0_22] : memref<9x8x4xbf16, #tpu.memory_space<vmem>>, vector<1x8x4xbf16>
    %35 = vector.shape_cast %34 : vector<1x8x4xbf16> to vector<8x4xbf16>
    %cst_23 = arith.constant dense<0.000000e+00> : vector<8x384xf32>
    %36 = tpu.matmul %35, %33, %cst_23 {dimension_numbers = #tpu.dot_dimension_numbers<[1], [0], [0], [1], [0, 0, 1, 1], [], []>} : vector<8x4xbf16>, vector<4x384xbf16>, vector<8x384xf32> -> vector<8x384xf32>
    %37 = arith.addf %32, %36 : vector<8x384xf32>
    %38 = vector.extract_strided_slice %1 {offsets = [0, 37], sizes = [4, 384], strides = [1, 1]} : vector<4x512xbf16> to vector<4x384xbf16>
    %c7 = arith.constant 7 : index
    %c0_24 = arith.constant 0 : index
    %c0_25 = arith.constant 0 : index
    %39 = vector.load %arg2[%c7, %c0_24, %c0_25] : memref<9x8x4xbf16, #tpu.memory_space<vmem>>, vector<1x8x4xbf16>
    %40 = vector.shape_cast %39 : vector<1x8x4xbf16> to vector<8x4xbf16>
    %cst_26 = arith.constant dense<0.000000e+00> : vector<8x384xf32>
    %41 = tpu.matmul %40, %38, %cst_26 {dimension_numbers = #tpu.dot_dimension_numbers<[1], [0], [0], [1], [0, 0, 1, 1], [], []>} : vector<8x4xbf16>, vector<4x384xbf16>, vector<8x384xf32> -> vector<8x384xf32>
    %42 = arith.addf %37, %41 : vector<8x384xf32>
    %43 = vector.extract_strided_slice %1 {offsets = [0, 38], sizes = [4, 384], strides = [1, 1]} : vector<4x512xbf16> to vector<4x384xbf16>
    %c8 = arith.constant 8 : index
    %c0_27 = arith.constant 0 : index
    %c0_28 = arith.constant 0 : index
    %44 = vector.load %arg2[%c8, %c0_27, %c0_28] : memref<9x8x4xbf16, #tpu.memory_space<vmem>>, vector<1x8x4xbf16>
    %45 = vector.shape_cast %44 : vector<1x8x4xbf16> to vector<8x4xbf16>
    %cst_29 = arith.constant dense<0.000000e+00> : vector<8x384xf32>
    %46 = tpu.matmul %45, %43, %cst_29 {dimension_numbers = #tpu.dot_dimension_numbers<[1], [0], [0], [1], [0, 0, 1, 1], [], []>} : vector<8x4xbf16>, vector<4x384xbf16>, vector<8x384xf32> -> vector<8x384xf32>
    %47 = arith.addf %42, %46 : vector<8x384xf32>
    %c0_30 = arith.constant 0 : index
    %c0_31 = arith.constant 0 : index
    %48 = vector.load %arg4[%c0_30, %c0_31] : memref<1x384xf32, #tpu.memory_space<vmem>>, vector<1x384xf32>
    %49 = vector.broadcast %48 : vector<1x384xf32> to vector<8x384xf32>
    %50 = arith.mulf %47, %49 : vector<8x384xf32>
    %cst_32 = arith.constant dense<0.000000e+00> : vector<8xf32>
    %51 = vector.multi_reduction <add>, %50, %cst_32 [1] : vector<8x384xf32> to vector<8xf32>
    %52 = vector.shape_cast %51 : vector<8xf32> to vector<8x1xf32>
    %cst_33 = arith.constant 3.906250e-03 : f32
    %53 = vector.broadcast %cst_33 : f32 to vector<8x1xf32>
    %54 = arith.mulf %52, %53 : vector<8x1xf32>
    %55 = arith.mulf %50, %47 : vector<8x384xf32>
    %cst_34 = arith.constant dense<0.000000e+00> : vector<8xf32>
    %56 = vector.multi_reduction <add>, %55, %cst_34 [1] : vector<8x384xf32> to vector<8xf32>
    %57 = vector.shape_cast %56 : vector<8xf32> to vector<8x1xf32>
    %cst_35 = arith.constant 3.906250e-03 : f32
    %58 = vector.broadcast %cst_35 : f32 to vector<8x1xf32>
    %59 = arith.mulf %57, %58 : vector<8x1xf32>
    %60 = arith.mulf %54, %54 : vector<8x1xf32>
    %61 = arith.subf %59, %60 : vector<8x1xf32>
    %c0_36 = arith.constant 0 : index
    %c0_37 = arith.constant 0 : index
    %62 = vector.load %arg3[%c0_36, %c0_37] : memref<8x2xf32, #tpu.memory_space<vmem>>, vector<8x2xf32>
    %63 = vector.extract_strided_slice %62 {offsets = [0, 0], sizes = [8, 1], strides = [1, 1]} : vector<8x2xf32> to vector<8x1xf32>
    %64 = vector.extract_strided_slice %62 {offsets = [0, 1], sizes = [8, 1], strides = [1, 1]} : vector<8x2xf32> to vector<8x1xf32>
    %cst_38 = arith.constant 9.99999974E-6 : f32
    %65 = vector.broadcast %cst_38 : f32 to vector<8x1xf32>
    %66 = arith.addf %61, %65 : vector<8x1xf32>
    %67 = math.rsqrt %66 : vector<8x1xf32>
    %68 = arith.mulf %63, %67 : vector<8x1xf32>
    %69 = arith.mulf %54, %68 : vector<8x1xf32>
    %70 = arith.subf %64, %69 : vector<8x1xf32>
    %71 = vector.broadcast %68 : vector<8x1xf32> to vector<8x384xf32>
    %72 = arith.mulf %47, %71 : vector<8x384xf32>
    %73 = vector.broadcast %70 : vector<8x1xf32> to vector<8x384xf32>
    %74 = arith.addf %72, %73 : vector<8x384xf32>
    %cst_39 = arith.constant 0.000000e+00 : f32
    %75 = vector.broadcast %cst_39 : f32 to vector<8x384xf32>
    %76 = arith.cmpf oge, %74, %75 : vector<8x384xf32>
    %cst_40 = arith.constant 2.000000e-01 : f32
    %77 = vector.broadcast %cst_40 : f32 to vector<8x384xf32>
    %78 = arith.mulf %77, %74 : vector<8x384xf32>
    %79 = arith.select %76, %74, %78 : vector<8x384xi1>, vector<8x384xf32>
    %c0_41 = arith.constant 0 : index
    %c0_42 = arith.constant 0 : index
    %c0_43 = arith.constant 0 : index
    %80 = vector.load %arg5[%c0_41, %c0_42, %c0_43] : memref<1x8x384xf32, #tpu.memory_space<vmem>>, vector<1x8x384xf32>
    %81 = vector.shape_cast %80 : vector<1x8x384xf32> to vector<8x384xf32>
    %82 = vector.shape_cast %79 : vector<8x384xf32> to vector<1x8x384xf32>
    tpu.vector_store %arg5[%c0_41, %c0_42, %c0_43], %82 {strides = array<i32>} : memref<1x8x384xf32, #tpu.memory_space<vmem>>, vector<1x8x384xf32>,
    return
  }
  func.func @transform_0(%arg0: i32) -> (i32, i32, i32) {
    %c0_i32 = arith.constant 0 : i32
    %c0_i32_0 = arith.constant 0 : i32
    %c0_i32_1 = arith.constant 0 : i32
    return %arg0, %c0_i32, %c0_i32_0 : i32, i32, i32
  }
  func.func @transform_1(%arg0: i32) -> (i32, i32, i32) {
    %c0_i32 = arith.constant 0 : i32
    %c0_i32_0 = arith.constant 0 : i32
    %c0_i32_1 = arith.constant 0 : i32
    %c0_i32_2 = arith.constant 0 : i32
    return %c0_i32, %c0_i32_0, %c0_i32_1 : i32, i32, i32
  }
  func.func @transform_2(%arg0: i32) -> (i32, i32) {
    %c0_i32 = arith.constant 0 : i32
    %c0_i32_0 = arith.constant 0 : i32
    %c0_i32_1 = arith.constant 0 : i32
    return %c0_i32, %c0_i32_0 : i32, i32
  }
  func.func @transform_3(%arg0: i32) -> (i32, i32) {
    %c0_i32 = arith.constant 0 : i32
    %c0_i32_0 = arith.constant 0 : i32
    %c0_i32_1 = arith.constant 0 : i32
    return %c0_i32, %c0_i32_0 : i32, i32
  }
  func.func @transform_4(%arg0: i32) -> (i32, i32, i32) {
    %c0_i32 = arith.constant 0 : i32
    %c0_i32_0 = arith.constant 0 : i32
    %c0_i32_1 = arith.constant 0 : i32
    return %arg0, %c0_i32, %c0_i32_0 : i32, i32, i32
  }
}

</mosaic_0001>

<llo_original>
// kernel: tpu_custom_call.1
$region0: #{tpu_custom_call.1}
  #allocation0 [shape = 'u32[]', space=smem, size = 0x4, offset = 0x4, fixed_abs, tag = 'smem constant byte address 0x4 - core index']
  #allocation1 [shape = 'u32[72,128]{1,0:T(1,128)}', space=vmem, size = 0x9000, scoped, tag = 'internal scratch']
  %s0 = inlined_call_operand.vmem [shape: bf16[2,4,512], index: 0, kind: input, shape index: {}]
  %s1 = inlined_call_operand.vmem [shape: bf16[9,8,4], index: 1, kind: input, shape index: {}]
  %s2 = inlined_call_operand.vmem [shape: f32[8,2], index: 2, kind: input, shape index: {}]
  %s3 = inlined_call_operand.vmem [shape: f32[1,384], index: 3, kind: input, shape index: {}]
  %s4 = inlined_call_operand.hbm [shape: f32[2,8,384], index: 4, kind: output, shape index: {}]
  %s5 = sld [smem:[#allocation0]]
  $region49: #{tpu_custom_call.1} parent=0
    _
  %s7 = ssub.s32 1, %s5
  %s8 = scalar_select 0, %s7, %s5
  $region1: #{tpu_custom_call.1} parent=0
    #allocation2 [shape = 'u8[24576]{0}', space=vmem, size = 0x6000, scoped, tag = 'output window, operand 0']
    #allocation3 [shape = 's32[2]{0}', space=sflag, size = 0x8, scoped, tag = 'scoped memory for tpu_custom_call.1']
    %9 = vsyncpa [#allocation3], 0
    %s10 = scalar_lea.sflag [#allocation3], 1
    %11 = vsyncpa %s10, 0
    loop: start=0, step=1, limit=4
    $region2: #{tpu_custom_call.1} parent=1 // loop_pre_header
      _
    $region3: #{tpu_custom_call.1} parent=1 // loop_header
      %s13 = sphi 0, %s17
      %p14 = scmp.ge.s32.totalorder %s13, 4
      %s23 = sphi 0, %s25
      %s26 = sphi 0, %s23
      %s27 = sphi 0, %s26
      %s43 = sphi 0, %s27
      %s47 = sphi 0, %s47
      %s49 = sphi 0, %s47
      %s50 = sphi 0, %s49
      %s64 = sphi 0, %s50
      %s68 = sphi 0, %s68
      %s70 = sphi 0, %s68
      %s71 = sphi 0, %s70
      %s85 = sphi 0, %s71
      %s89 = sphi 0, %s89
      %s91 = sphi 0, %s89
      %s92 = sphi 0, %s91
      %s106 = sphi 0, %s92
      %s112 = sphi 0, %s114
      %s115 = sphi 0, %s112
      %s116 = sphi 0, %s115
      %s132 = sphi 0, %s116
    $region4: #{tpu_custom_call.1} parent=1 // loop_header_branch
      %16 = sbr.rel (%p14) target = $region8
    $region5: #{tpu_custom_call.1} parent=1 // loop_body
      %s18 = ssub.s32 %s13, 1
      %s19 = ssub.s32 %s13, 2
      %s20 = sadd.s32 %s13, 1
      %s21 = ssub.s32 %s13, %s20
      %p22 = scmp.eq.s32.totalorder %s21, 0
      %s24 = sadd.s32 %s23, 1
      %s25 = scalar_select %p22, %s23, %s24
      %p28 = pneg %p22
      %p29 = scmp.eq.s32.totalorder %s13, 1
      %p30 = por %p28, %p29
      %p31 = scmp.ne.s32.totalorder %s23, %s26
      %p32 = scmp.eq.s32.totalorder %s13, 0
      %p33 = por %p31, %p32
      %p34 = scmp.ne.s32.totalorder %s23, %s26
      %p35 = scmp.eq.s32.totalorder %s18, 1
      %p36 = por %p34, %p35
      %p37 = scmp.ne.s32.totalorder %s26, %s27
      %p38 = scmp.eq.s32.totalorder %s18, 0
      %p39 = por %p37, %p38
      %p40 = scmp.ne.s32.totalorder %s26, %s27
      %p41 = scmp.eq.s32.totalorder %s19, 1
      %p42 = por %p40, %p41
      %p44 = scmp.ne.s32.totalorder %s27, %s43
      %p45 = scmp.eq.s32.totalorder %s19, 0
      %p46 = por %p44, %p45
      %s48 = sadd.s32 %s47, 1
      %p51 = scmp.eq.s32.totalorder %s13, 1
      %p52 = scmp.ne.s32.totalorder %s47, %s49
      %p53 = scmp.eq.s32.totalorder %s13, 0
      %p54 = por %p52, %p53
      %p55 = scmp.ne.s32.totalorder %s47, %s49
      %p56 = scmp.eq.s32.totalorder %s18, 1
      %p57 = por %p55, %p56
      %p58 = scmp.ne.s32.totalorder %s49, %s50
      %p59 = scmp.eq.s32.totalorder %s18, 0
      %p60 = por %p58, %p59
      %p61 = scmp.ne.s32.totalorder %s49, %s50
      %p62 = scmp.eq.s32.totalorder %s19, 1
      %p63 = por %p61, %p62
      %p65 = scmp.ne.s32.totalorder %s50, %s64
      %p66 = scmp.eq.s32.totalorder %s19, 0
      %p67 = por %p65, %p66
      %s69 = sadd.s32 %s68, 1
      %p72 = scmp.eq.s32.totalorder %s13, 1
      %p73 = scmp.ne.s32.totalorder %s68, %s70
      %p74 = scmp.eq.s32.totalorder %s13, 0
      %p75 = por %p73, %p74
      %p76 = scmp.ne.s32.totalorder %s68, %s70
      %p77 = scmp.eq.s32.totalorder %s18, 1
      %p78 = por %p76, %p77
      %p79 = scmp.ne.s32.totalorder %s70, %s71
      %p80 = scmp.eq.s32.totalorder %s18, 0
      %p81 = por %p79, %p80
      %p82 = scmp.ne.s32.totalorder %s70, %s71
      %p83 = scmp.eq.s32.totalorder %s19, 1
      %p84 = por %p82, %p83
      %p86 = scmp.ne.s32.totalorder %s71, %s85
      %p87 = scmp.eq.s32.totalorder %s19, 0
      %p88 = por %p86, %p87
      %s90 = sadd.s32 %s89, 1
      %p93 = scmp.eq.s32.totalorder %s13, 1
      %p94 = scmp.ne.s32.totalorder %s89, %s91
      %p95 = scmp.eq.s32.totalorder %s13, 0
      %p96 = por %p94, %p95
      %p97 = scmp.ne.s32.totalorder %s89, %s91
      %p98 = scmp.eq.s32.totalorder %s18, 1
      %p99 = por %p97, %p98
      %p100 = scmp.ne.s32.totalorder %s91, %s92
      %p101 = scmp.eq.s32.totalorder %s18, 0
      %p102 = por %p100, %p101
      %p103 = scmp.ne.s32.totalorder %s91, %s92
      %p104 = scmp.eq.s32.totalorder %s19, 1
      %p105 = por %p103, %p104
      %p107 = scmp.ne.s32.totalorder %s92, %s106
      %p108 = scmp.eq.s32.totalorder %s19, 0
      %p109 = por %p107, %p108
      %s110 = ssub.s32 %s13, %s20
      %p111 = scmp.eq.s32.totalorder %s110, 0
      %s113 = sadd.s32 %s112, 1
      %s114 = scalar_select %p111, %s112, %s113
      %p117 = pneg %p111
      %p118 = scmp.eq.s32.totalorder %s13, 1
      %p119 = por %p117, %p118
      %p120 = scmp.ne.s32.totalorder %s112, %s115
      %p121 = scmp.eq.s32.totalorder %s13, 0
      %p122 = por %p120, %p121
      %p123 = scmp.ne.s32.totalorder %s112, %s115
      %p124 = scmp.eq.s32.totalorder %s18, 1
      %p125 = por %p123, %p124
      %p126 = scmp.ne.s32.totalorder %s115, %s116
      %p127 = scmp.eq.s32.totalorder %s18, 0
      %p128 = por %p126, %p127
      %p129 = scmp.ne.s32.totalorder %s115, %s116
      %p130 = scmp.eq.s32.totalorder %s19, 1
      %p131 = por %p129, %p130
      %p133 = scmp.ne.s32.totalorder %s116, %s132
      %p134 = scmp.eq.s32.totalorder %s19, 0
      %p135 = por %p133, %p134
      %p136 = scmp.le.s32.totalorder 1, %s13
      %p137 = scmp.lt.s32.totalorder %s13, 3
      %p138 = pnand %p136, %p137
      %p139 = pneg %p138
      // Predicated region
      $region9: #{tpu_custom_call.1} parent=5 // pred_check
        _
      $region10: #{tpu_custom_call.1} parent=5 // pred_check_branch
        %141 = sbr.rel (%p138) target = $region12
      $region11: #{tpu_custom_call.1} parent=5 // pred_region
        %s142 = ssub.s32 %s13, 1
        // Predicated region
        $region13: #{tpu_custom_call.1} parent=11 // pred_check
          %p143 = pneg %p60
        $region14: #{tpu_custom_call.1} parent=11 // pred_check_branch
          %145 = sbr.rel (%p143) target = $region16
        $region15: #{tpu_custom_call.1} parent=11 // pred_region
          _
        $region16: #{tpu_custom_call.1} parent=11 // pred_fallthru
          _
        // Predicated region
        $region17: #{tpu_custom_call.1} parent=11 // pred_check
          %p146 = pneg %p81
        $region18: #{tpu_custom_call.1} parent=11 // pred_check_branch
          %148 = sbr.rel (%p146) target = $region20
        $region19: #{tpu_custom_call.1} parent=11 // pred_region
          _
        $region20: #{tpu_custom_call.1} parent=11 // pred_fallthru
          _
        // Predicated region
        $region21: #{tpu_custom_call.1} parent=11 // pred_check
          %p149 = pneg %p102
        $region22: #{tpu_custom_call.1} parent=11 // pred_check_branch
          %151 = sbr.rel (%p149) target = $region24
        $region23: #{tpu_custom_call.1} parent=11 // pred_region
          _
        $region24: #{tpu_custom_call.1} parent=11 // pred_fallthru
          _
      $region12: #{tpu_custom_call.1} parent=5 // pred_fallthru
        _
      %p152 = scmp.lt.s32.totalorder %s13, 2
      // Predicated region
      $region25: #{tpu_custom_call.1} parent=5 // pred_check
        %p153 = pneg %p152
      $region26: #{tpu_custom_call.1} parent=5 // pred_check_branch
        %155 = sbr.rel (%p153) target = $region28
      $region27: #{tpu_custom_call.1} parent=5 // pred_region
        // Predicated region
        $region29: #{tpu_custom_call.1} parent=27 // pred_check
          %p156 = pneg %p33
        $region30: #{tpu_custom_call.1} parent=27 // pred_check_branch
          %158 = sbr.rel (%p156) target = $region32
        $region31: #{tpu_custom_call.1} parent=27 // pred_region
          %p159 = scmp.lt.s32.totalorder %s13, 1
          %s160 = scalar_select %p159, %s13, 1
          %s161 = smul.addr %s160, 4
          %s162 = smul.addr %s161, 2
          %s163 = scalar_lea.vmem %s0, %s162
        $region32: #{tpu_custom_call.1} parent=27 // pred_fallthru
          _
      $region28: #{tpu_custom_call.1} parent=5 // pred_fallthru
        _
      %p164 = scmp.le.s32.totalorder 1, %s13
      %p165 = scmp.lt.s32.totalorder %s13, 3
      %p166 = pnand %p164, %p165
      %p167 = pneg %p166
      // Predicated region
      $region33: #{tpu_custom_call.1} parent=5 // pred_check
        _
      $region34: #{tpu_custom_call.1} parent=5 // pred_check_branch
        %169 = sbr.rel (%p166) target = $region36
      $region35: #{tpu_custom_call.1} parent=5 // pred_region
        %s170 = ssub.s32 %s13, 1
        %p171 = scmp.lt.s32.totalorder %s18, 1
        %s172 = scalar_select %p171, %s18, 1
        %s173 = smul.addr %s172, 4
        %s174 = smul.addr %s173, 2
        %s175 = scalar_lea.vmem %s0, %s174
        %p176 = pneg %p39
        %p177 = pneg %p36
        %p178 = pneg %p60
        %p179 = pneg %p57
        %p180 = pneg %p81
        %p181 = pneg %p78
        %p182 = pneg %p102
        %p183 = pneg %p99
        %p184 = pneg %p128
        %p185 = pneg %p125
        %s186 = sand.u32 %s115, 1
        %s187 = scalar_lea.sflag [#allocation3], %s186
        %s188 = sand.u32 %s115, 1
        %s189 = smul.addr %s188, 24
        %s190 = scalar_lea.vmem [#allocation2], %s189
        %p191 = scmp.lt.s32.totalorder %s18, 1
        %s192 = scalar_select %p191, %s18, 1
        %s193 = smul.addr %s192, 4
        %s194 = smul.addr %s193, 2
        %s195 = scalar_lea.vmem %s0, %s194
        %v197 = vld [vmem:[%s195] sm:$0xff]
        %v198 = vld [vmem:[%s1] sm:$0xf]
        %s199 = scalar_lea.vmem %s1, 4
        %v200 = vld [vmem:[%s199] sm:$0xf]
        %202 = vst [vmem:[#allocation1] ss:$4 sm:$0xff] %v197
        %v203 = vld.sshfl [vmem:[#allocation1] sm:$0xff pattern:$0x73625140]
        %v205 = vld.sshfl [vmem:[#allocation1 + $0x8] sm:$0xff pattern:$0x73625140]
        %v207 = vld.sshfl [vmem:[#allocation1 + $0x10] sm:$0xff pattern:$0x73625140]
        %v209 = vld.sshfl [vmem:[#allocation1 + $0x18] sm:$0xff pattern:$0x73625140]
        %211 = vrot.lane.b32.xlu0 %v203, 127
        %v212 = vpop.permute.xlu0 %211
        %213 = vrot.lane.b32.xlu0 %v205, 127
        %v214 = vpop.permute.xlu0 %213
        %215 = vrot.lane.b32.xlu0 %v207, 127
        %v216 = vpop.permute.xlu0 %215
        %217 = vrot.lane.b32.xlu0 %v209, 127
        %v218 = vpop.permute.xlu0 %217
        %vm219 = vcmask 1039360
        %v220 = vsel %vm219, %v212, %v214
        %v221 = vsel %vm219, %v214, %v216
        %v222 = vsel %vm219, %v216, %v218
        %vm223 = vcmask 31744
        %v225 = vsel %vm223, %v200, 0
        %vm227 = vcmask 1041408
        %v229 = vsel %vm227, %v220, 0
        %v232 = vsel %vm227, %v221, 0
        %v235 = vsel %vm227, %v222, 0
        %237 = vmatpush.bf16.msra.mxu0 0
        %238 = vmatpush.bf16.msra.mxu0 0
        %239 = vmatpush.bf16.msra.mxu0 0
        %240 = vmatpush.bf16.msra.mxu0 0
        %241 = vmatpush.bf16.msra.mxu0 0
        %242 = vmatpush.bf16.msra.mxu0 0
        %243 = vmatpush.bf16.msra.mxu0 0
        %244 = vmatpush.bf16.msra.mxu0 %v229
        %245 = vmatmul.bf16.gmra.mxu0 %v225
        %v246 = vpop.f32.mrf.mxu0
        %v247 = vadd.f32 0.0, %v246
        %v248 = vpop.f32.mrf.mxu0
        %249 = vdwg.mxu0
        %250 = vmatpush.bf16.msra.mxu0 0
        %251 = vmatpush.bf16.msra.mxu0 0
        %252 = vmatpush.bf16.msra.mxu0 0
        %253 = vmatpush.bf16.msra.mxu0 0
        %254 = vmatpush.bf16.msra.mxu0 0
        %255 = vmatpush.bf16.msra.mxu0 0
        %256 = vmatpush.bf16.msra.mxu0 0
        %257 = vmatpush.bf16.msra.mxu0 %v232
        %258 = vmatmul.bf16.gmra.mxu0 %v225
        %v259 = vpop.f32.mrf.mxu0
        %v260 = vadd.f32 0.0, %v259
        %v261 = vpop.f32.mrf.mxu0
        %262 = vdwg.mxu0
        %263 = vmatpush.bf16.msra.mxu0 0
        %264 = vmatpush.bf16.msra.mxu0 0
        %265 = vmatpush.bf16.msra.mxu0 0
        %266 = vmatpush.bf16.msra.mxu0 0
        %267 = vmatpush.bf16.msra.mxu0 0
        %268 = vmatpush.bf16.msra.mxu0 0
        %269 = vmatpush.bf16.msra.mxu0 0
        %270 = vmatpush.bf16.msra.mxu0 %v235
        %271 = vmatmul.bf16.gmra.mxu0 %v225
        %v272 = vpop.f32.mrf.mxu0
        %v273 = vadd.f32 0.0, %v272
        %v274 = vpop.f32.mrf.mxu0
        %275 = vdwg.mxu0
        %276 = vst [vmem:[#allocation1] ss:$4 sm:$0xff] %v197
        %v277 = vld.sshfl [vmem:[#allocation1] sm:$0xff pattern:$0x73625140]
        %v278 = vld.sshfl [vmem:[#allocation1 + $0x8] sm:$0xff pattern:$0x73625140]
        %v279 = vld.sshfl [vmem:[#allocation1 + $0x10] sm:$0xff pattern:$0x73625140]
        %v281 = vsel %vm223, %v198, 0
        %v283 = vsel %vm227, %v277, 0
        %v285 = vsel %vm227, %v278, 0
        %v287 = vsel %vm227, %v279, 0
        %289 = vmatpush.bf16.msra.mxu0 0
        %290 = vmatpush.bf16.msra.mxu0 0
        %291 = vmatpush.bf16.msra.mxu0 0
        %292 = vmatpush.bf16.msra.mxu0 0
        %293 = vmatpush.bf16.msra.mxu0 0
        %294 = vmatpush.bf16.msra.mxu0 0
        %295 = vmatpush.bf16.msra.mxu0 0
        %296 = vmatpush.bf16.msra.mxu0 %v283
        %297 = vmatmul.bf16.gmra.mxu0 %v281
        %v298 = vpop.f32.mrf.mxu0
        %v299 = vadd.f32 %v247, %v298
        %v300 = vpop.f32.mrf.mxu0
        %301 = vdwg.mxu0
        %302 = vmatpush.bf16.msra.mxu0 0
        %303 = vmatpush.bf16.msra.mxu0 0
        %304 = vmatpush.bf16.msra.mxu0 0
        %305 = vmatpush.bf16.msra.mxu0 0
        %306 = vmatpush.bf16.msra.mxu0 0
        %307 = vmatpush.bf16.msra.mxu0 0
        %308 = vmatpush.bf16.msra.mxu0 0
        %309 = vmatpush.bf16.msra.mxu0 %v285
        %310 = vmatmul.bf16.gmra.mxu0 %v281
        %v311 = vpop.f32.mrf.mxu0
        %v312 = vadd.f32 %v260, %v311
        %v313 = vpop.f32.mrf.mxu0
        %314 = vdwg.mxu0
        %315 = vmatpush.bf16.msra.mxu0 0
        %316 = vmatpush.bf16.msra.mxu0 0
        %317 = vmatpush.bf16.msra.mxu0 0
        %318 = vmatpush.bf16.msra.mxu0 0
        %319 = vmatpush.bf16.msra.mxu0 0
        %320 = vmatpush.bf16.msra.mxu0 0
        %321 = vmatpush.bf16.msra.mxu0 0
        %322 = vmatpush.bf16.msra.mxu0 %v287
        %323 = vmatmul.bf16.gmra.mxu0 %v281
        %v324 = vpop.f32.mrf.mxu0
        %v325 = vadd.f32 %v273, %v324
        %v326 = vpop.f32.mrf.mxu0
        %327 = vdwg.mxu0
        %s328 = scalar_lea.vmem %s1, 8
        %v329 = vld [vmem:[%s328] sm:$0xf]
        %330 = vst [vmem:[#allocation1] ss:$4 sm:$0xff] %v197
        %v331 = vld.sshfl [vmem:[#allocation1] sm:$0xff pattern:$0x73625140]
        %v333 = vld.sshfl [vmem:[#allocation1 + $0x8] sm:$0xff pattern:$0x73625140]
        %v335 = vld.sshfl [vmem:[#allocation1 + $0x10] sm:$0xff pattern:$0x73625140]
        %v337 = vld.sshfl [vmem:[#allocation1 + $0x18] sm:$0xff pattern:$0x73625140]
        %339 = vrot.lane.b32.xlu0 %v331, 126
        %v340 = vpop.permute.xlu0 %339
        %341 = vrot.lane.b32.xlu0 %v333, 126
        %v342 = vpop.permute.xlu0 %341
        %343 = vrot.lane.b32.xlu0 %v335, 126
        %v344 = vpop.permute.xlu0 %343
        %345 = vrot.lane.b32.xlu0 %v337, 126
        %v346 = vpop.permute.xlu0 %345
        %vm347 = vcmask 1031168
        %v348 = vsel %vm347, %v340, %v342
        %v349 = vsel %vm347, %v342, %v344
        %v350 = vsel %vm347, %v344, %v346
        %v352 = vsel %vm223, %v329, 0
        %v355 = vsel %vm227, %v348, 0
        %v358 = vsel %vm227, %v349, 0
        %v361 = vsel %vm227, %v350, 0
        %363 = vmatpush.bf16.msra.mxu0 0
        %364 = vmatpush.bf16.msra.mxu0 0
        %365 = vmatpush.bf16.msra.mxu0 0
        %366 = vmatpush.bf16.msra.mxu0 0
        %367 = vmatpush.bf16.msra.mxu0 0
        %368 = vmatpush.bf16.msra.mxu0 0
        %369 = vmatpush.bf16.msra.mxu0 0
        %370 = vmatpush.bf16.msra.mxu0 %v355
        %371 = vmatmul.bf16.gmra.mxu0 %v352
        %v372 = vpop.f32.mrf.mxu0
        %v373 = vadd.f32 0.0, %v372
        %v374 = vpop.f32.mrf.mxu0
        %375 = vdwg.mxu0
        %376 = vmatpush.bf16.msra.mxu0 0
        %377 = vmatpush.bf16.msra.mxu0 0
        %378 = vmatpush.bf16.msra.mxu0 0
        %379 = vmatpush.bf16.msra.mxu0 0
        %380 = vmatpush.bf16.msra.mxu0 0
        %381 = vmatpush.bf16.msra.mxu0 0
        %382 = vmatpush.bf16.msra.mxu0 0
        %383 = vmatpush.bf16.msra.mxu0 %v358
        %384 = vmatmul.bf16.gmra.mxu0 %v352
        %v385 = vpop.f32.mrf.mxu0
        %v386 = vadd.f32 0.0, %v385
        %v387 = vpop.f32.mrf.mxu0
        %388 = vdwg.mxu0
        %389 = vmatpush.bf16.msra.mxu0 0
        %390 = vmatpush.bf16.msra.mxu0 0
        %391 = vmatpush.bf16.msra.mxu0 0
        %392 = vmatpush.bf16.msra.mxu0 0
        %393 = vmatpush.bf16.msra.mxu0 0
        %394 = vmatpush.bf16.msra.mxu0 0
        %395 = vmatpush.bf16.msra.mxu0 0
        %396 = vmatpush.bf16.msra.mxu0 %v361
        %397 = vmatmul.bf16.gmra.mxu0 %v352
        %v398 = vpop.f32.mrf.mxu0
        %v399 = vadd.f32 0.0, %v398
        %v400 = vpop.f32.mrf.mxu0
        %401 = vdwg.mxu0
        %v402 = vadd.f32 %v299, %v373
        %v403 = vadd.f32 %v312, %v386
        %v404 = vadd.f32 %v325, %v399
        %s405 = scalar_lea.vmem %s1, 12
        %v406 = vld [vmem:[%s405] sm:$0xf]
        %407 = vst [vmem:[#allocation1] ss:$4 sm:$0xff] %v197
        %v408 = vld.sshfl [vmem:[#allocation1] sm:$0xff pattern:$0x73625140]
        %v410 = vld.sshfl [vmem:[#allocation1 + $0x8] sm:$0xff pattern:$0x73625140]
        %v412 = vld.sshfl [vmem:[#allocation1 + $0x10] sm:$0xff pattern:$0x73625140]
        %v414 = vld.sshfl [vmem:[#allocation1 + $0x18] sm:$0xff pattern:$0x73625140]
        %416 = vrot.lane.b32.xlu0 %v408, 110
        %v417 = vpop.permute.xlu0 %416
        %418 = vrot.lane.b32.xlu0 %v410, 110
        %v419 = vpop.permute.xlu0 %418
        %420 = vrot.lane.b32.xlu0 %v412, 110
        %v421 = vpop.permute.xlu0 %420
        %422 = vrot.lane.b32.xlu0 %v414, 110
        %v423 = vpop.permute.xlu0 %422
        %vm424 = vcmask 900096
        %v425 = vsel %vm424, %v417, %v419
        %v426 = vsel %vm424, %v419, %v421
        %v427 = vsel %vm424, %v421, %v423
        %v429 = vsel %vm223, %v406, 0
        %v432 = vsel %vm227, %v425, 0
        %v435 = vsel %vm227, %v426, 0
        %v438 = vsel %vm227, %v427, 0
        %440 = vmatpush.bf16.msra.mxu0 0
        %441 = vmatpush.bf16.msra.mxu0 0
        %442 = vmatpush.bf16.msra.mxu0 0
        %443 = vmatpush.bf16.msra.mxu0 0
        %444 = vmatpush.bf16.msra.mxu0 0
        %445 = vmatpush.bf16.msra.mxu0 0
        %446 = vmatpush.bf16.msra.mxu0 0
        %447 = vmatpush.bf16.msra.mxu0 %v432
        %448 = vmatmul.bf16.gmra.mxu0 %v429
        %v449 = vpop.f32.mrf.mxu0
        %v450 = vadd.f32 0.0, %v449
        %v451 = vpop.f32.mrf.mxu0
        %452 = vdwg.mxu0
        %453 = vmatpush.bf16.msra.mxu0 0
        %454 = vmatpush.bf16.msra.mxu0 0
        %455 = vmatpush.bf16.msra.mxu0 0
        %456 = vmatpush.bf16.msra.mxu0 0
        %457 = vmatpush.bf16.msra.mxu0 0
        %458 = vmatpush.bf16.msra.mxu0 0
        %459 = vmatpush.bf16.msra.mxu0 0
        %460 = vmatpush.bf16.msra.mxu0 %v435
        %461 = vmatmul.bf16.gmra.mxu0 %v429
        %v462 = vpop.f32.mrf.mxu0
        %v463 = vadd.f32 0.0, %v462
        %v464 = vpop.f32.mrf.mxu0
        %465 = vdwg.mxu0
        %466 = vmatpush.bf16.msra.mxu0 0
        %467 = vmatpush.bf16.msra.mxu0 0
        %468 = vmatpush.bf16.msra.mxu0 0
        %469 = vmatpush.bf16.msra.mxu0 0
        %470 = vmatpush.bf16.msra.mxu0 0
        %471 = vmatpush.bf16.msra.mxu0 0
        %472 = vmatpush.bf16.msra.mxu0 0
        %473 = vmatpush.bf16.msra.mxu0 %v438
        %474 = vmatmul.bf16.gmra.mxu0 %v429
        %v475 = vpop.f32.mrf.mxu0
        %v476 = vadd.f32 0.0, %v475
        %v477 = vpop.f32.mrf.mxu0
        %478 = vdwg.mxu0
        %v479 = vadd.f32 %v402, %v450
        %v480 = vadd.f32 %v403, %v463
        %v481 = vadd.f32 %v404, %v476
        %s482 = scalar_lea.vmem %s1, 16
        %v483 = vld [vmem:[%s482] sm:$0xf]
        %484 = vst [vmem:[#allocation1] ss:$4 sm:$0xff] %v197
        %v485 = vld.sshfl [vmem:[#allocation1] sm:$0xff pattern:$0x73625140]
        %v487 = vld.sshfl [vmem:[#allocation1 + $0x8] sm:$0xff pattern:$0x73625140]
        %v489 = vld.sshfl [vmem:[#allocation1 + $0x10] sm:$0xff pattern:$0x73625140]
        %v491 = vld.sshfl [vmem:[#allocation1 + $0x18] sm:$0xff pattern:$0x73625140]
        %493 = vrot.lane.b32.xlu0 %v485, 109
        %v494 = vpop.permute.xlu0 %493
        %495 = vrot.lane.b32.xlu0 %v487, 109
        %v496 = vpop.permute.xlu0 %495
        %497 = vrot.lane.b32.xlu0 %v489, 109
        %v498 = vpop.permute.xlu0 %497
        %499 = vrot.lane.b32.xlu0 %v491, 109
        %v500 = vpop.permute.xlu0 %499
        %vm501 = vcmask 891904
        %v502 = vsel %vm501, %v494, %v496
        %v503 = vsel %vm501, %v496, %v498
        %v504 = vsel %vm501, %v498, %v500
        %v506 = vsel %vm223, %v483, 0
        %v509 = vsel %vm227, %v502, 0
        %v512 = vsel %vm227, %v503, 0
        %v515 = vsel %vm227, %v504, 0
        %517 = vmatpush.bf16.msra.mxu0 0
        %518 = vmatpush.bf16.msra.mxu0 0
        %519 = vmatpush.bf16.msra.mxu0 0
        %520 = vmatpush.bf16.msra.mxu0 0
        %521 = vmatpush.bf16.msra.mxu0 0
        %522 = vmatpush.bf16.msra.mxu0 0
        %523 = vmatpush.bf16.msra.mxu0 0
        %524 = vmatpush.bf16.msra.mxu0 %v509
        %525 = vmatmul.bf16.gmra.mxu0 %v506
        %v526 = vpop.f32.mrf.mxu0
        %v527 = vadd.f32 0.0, %v526
        %v528 = vpop.f32.mrf.mxu0
        %529 = vdwg.mxu0
        %530 = vmatpush.bf16.msra.mxu0 0
        %531 = vmatpush.bf16.msra.mxu0 0
        %532 = vmatpush.bf16.msra.mxu0 0
        %533 = vmatpush.bf16.msra.mxu0 0
        %534 = vmatpush.bf16.msra.mxu0 0
        %535 = vmatpush.bf16.msra.mxu0 0
        %536 = vmatpush.bf16.msra.mxu0 0
        %537 = vmatpush.bf16.msra.mxu0 %v512
        %538 = vmatmul.bf16.gmra.mxu0 %v506
        %v539 = vpop.f32.mrf.mxu0
        %v540 = vadd.f32 0.0, %v539
        %v541 = vpop.f32.mrf.mxu0
        %542 = vdwg.mxu0
        %543 = vmatpush.bf16.msra.mxu0 0
        %544 = vmatpush.bf16.msra.mxu0 0
        %545 = vmatpush.bf16.msra.mxu0 0
        %546 = vmatpush.bf16.msra.mxu0 0
        %547 = vmatpush.bf16.msra.mxu0 0
        %548 = vmatpush.bf16.msra.mxu0 0
        %549 = vmatpush.bf16.msra.mxu0 0
        %550 = vmatpush.bf16.msra.mxu0 %v515
        %551 = vmatmul.bf16.gmra.mxu0 %v506
        %v552 = vpop.f32.mrf.mxu0
        %v553 = vadd.f32 0.0, %v552
        %v554 = vpop.f32.mrf.mxu0
        %555 = vdwg.mxu0
        %v556 = vadd.f32 %v479, %v527
        %v557 = vadd.f32 %v480, %v540
        %v558 = vadd.f32 %v481, %v553
        %s559 = scalar_lea.vmem %s1, 20
        %v560 = vld [vmem:[%s559] sm:$0xf]
        %561 = vst [vmem:[#allocation1] ss:$4 sm:$0xff] %v197
        %v562 = vld.sshfl [vmem:[#allocation1] sm:$0xff pattern:$0x73625140]
        %v564 = vld.sshfl [vmem:[#allocation1 + $0x8] sm:$0xff pattern:$0x73625140]
        %v566 = vld.sshfl [vmem:[#allocation1 + $0x10] sm:$0xff pattern:$0x73625140]
        %v568 = vld.sshfl [vmem:[#allocation1 + $0x18] sm:$0xff pattern:$0x73625140]
        %570 = vrot.lane.b32.xlu0 %v562, 108
        %v571 = vpop.permute.xlu0 %570
        %572 = vrot.lane.b32.xlu0 %v564, 108
        %v573 = vpop.permute.xlu0 %572
        %574 = vrot.lane.b32.xlu0 %v566, 108
        %v575 = vpop.permute.xlu0 %574
        %576 = vrot.lane.b32.xlu0 %v568, 108
        %v577 = vpop.permute.xlu0 %576
        %vm578 = vcmask 883712
        %v579 = vsel %vm578, %v571, %v573
        %v580 = vsel %vm578, %v573, %v575
        %v581 = vsel %vm578, %v575, %v577
        %v583 = vsel %vm223, %v560, 0
        %v586 = vsel %vm227, %v579, 0
        %v589 = vsel %vm227, %v580, 0
        %v592 = vsel %vm227, %v581, 0
        %594 = vmatpush.bf16.msra.mxu0 0
        %595 = vmatpush.bf16.msra.mxu0 0
        %596 = vmatpush.bf16.msra.mxu0 0
        %597 = vmatpush.bf16.msra.mxu0 0
        %598 = vmatpush.bf16.msra.mxu0 0
        %599 = vmatpush.bf16.msra.mxu0 0
        %600 = vmatpush.bf16.msra.mxu0 0
        %601 = vmatpush.bf16.msra.mxu0 %v586
        %602 = vmatmul.bf16.gmra.mxu0 %v583
        %v603 = vpop.f32.mrf.mxu0
        %v604 = vadd.f32 0.0, %v603
        %v605 = vpop.f32.mrf.mxu0
        %606 = vdwg.mxu0
        %607 = vmatpush.bf16.msra.mxu0 0
        %608 = vmatpush.bf16.msra.mxu0 0
        %609 = vmatpush.bf16.msra.mxu0 0
        %610 = vmatpush.bf16.msra.mxu0 0
        %611 = vmatpush.bf16.msra.mxu0 0
        %612 = vmatpush.bf16.msra.mxu0 0
        %613 = vmatpush.bf16.msra.mxu0 0
        %614 = vmatpush.bf16.msra.mxu0 %v589
        %615 = vmatmul.bf16.gmra.mxu0 %v583
        %v616 = vpop.f32.mrf.mxu0
        %v617 = vadd.f32 0.0, %v616
        %v618 = vpop.f32.mrf.mxu0
        %619 = vdwg.mxu0
        %620 = vmatpush.bf16.msra.mxu0 0
        %621 = vmatpush.bf16.msra.mxu0 0
        %622 = vmatpush.bf16.msra.mxu0 0
        %623 = vmatpush.bf16.msra.mxu0 0
        %624 = vmatpush.bf16.msra.mxu0 0
        %625 = vmatpush.bf16.msra.mxu0 0
        %626 = vmatpush.bf16.msra.mxu0 0
        %627 = vmatpush.bf16.msra.mxu0 %v592
        %628 = vmatmul.bf16.gmra.mxu0 %v583
        %v629 = vpop.f32.mrf.mxu0
        %v630 = vadd.f32 0.0, %v629
        %v631 = vpop.f32.mrf.mxu0
        %632 = vdwg.mxu0
        %v633 = vadd.f32 %v556, %v604
        %v634 = vadd.f32 %v557, %v617
        %v635 = vadd.f32 %v558, %v630
        %s636 = scalar_lea.vmem %s1, 24
        %v637 = vld [vmem:[%s636] sm:$0xf]
        %638 = vst [vmem:[#allocation1] ss:$4 sm:$0xff] %v197
        %v639 = vld.sshfl [vmem:[#allocation1] sm:$0xff pattern:$0x73625140]
        %v641 = vld.sshfl [vmem:[#allocation1 + $0x8] sm:$0xff pattern:$0x73625140]
        %v643 = vld.sshfl [vmem:[#allocation1 + $0x10] sm:$0xff pattern:$0x73625140]
        %v645 = vld.sshfl [vmem:[#allocation1 + $0x18] sm:$0xff pattern:$0x73625140]
        %647 = vrot.lane.b32.xlu0 %v639, 92
        %v648 = vpop.permute.xlu0 %647
        %649 = vrot.lane.b32.xlu0 %v641, 92
        %v650 = vpop.permute.xlu0 %649
        %651 = vrot.lane.b32.xlu0 %v643, 92
        %v652 = vpop.permute.xlu0 %651
        %653 = vrot.lane.b32.xlu0 %v645, 92
        %v654 = vpop.permute.xlu0 %653
        %vm655 = vcmask 752640
        %v656 = vsel %vm655, %v648, %v650
        %v657 = vsel %vm655, %v650, %v652
        %v658 = vsel %vm655, %v652, %v654
        %v660 = vsel %vm223, %v637, 0
        %v663 = vsel %vm227, %v656, 0
        %v666 = vsel %vm227, %v657, 0
        %v669 = vsel %vm227, %v658, 0
        %671 = vmatpush.bf16.msra.mxu0 0
        %672 = vmatpush.bf16.msra.mxu0 0
        %673 = vmatpush.bf16.msra.mxu0 0
        %674 = vmatpush.bf16.msra.mxu0 0
        %675 = vmatpush.bf16.msra.mxu0 0
        %676 = vmatpush.bf16.msra.mxu0 0
        %677 = vmatpush.bf16.msra.mxu0 0
        %678 = vmatpush.bf16.msra.mxu0 %v663
        %679 = vmatmul.bf16.gmra.mxu0 %v660
        %v680 = vpop.f32.mrf.mxu0
        %v681 = vadd.f32 0.0, %v680
        %v682 = vpop.f32.mrf.mxu0
        %683 = vdwg.mxu0
        %684 = vmatpush.bf16.msra.mxu0 0
        %685 = vmatpush.bf16.msra.mxu0 0
        %686 = vmatpush.bf16.msra.mxu0 0
        %687 = vmatpush.bf16.msra.mxu0 0
        %688 = vmatpush.bf16.msra.mxu0 0
        %689 = vmatpush.bf16.msra.mxu0 0
        %690 = vmatpush.bf16.msra.mxu0 0
        %691 = vmatpush.bf16.msra.mxu0 %v666
        %692 = vmatmul.bf16.gmra.mxu0 %v660
        %v693 = vpop.f32.mrf.mxu0
        %v694 = vadd.f32 0.0, %v693
        %v695 = vpop.f32.mrf.mxu0
        %696 = vdwg.mxu0
        %697 = vmatpush.bf16.msra.mxu0 0
        %698 = vmatpush.bf16.msra.mxu0 0
        %699 = vmatpush.bf16.msra.mxu0 0
        %700 = vmatpush.bf16.msra.mxu0 0
        %701 = vmatpush.bf16.msra.mxu0 0
        %702 = vmatpush.bf16.msra.mxu0 0
        %703 = vmatpush.bf16.msra.mxu0 0
        %704 = vmatpush.bf16.msra.mxu0 %v669
        %705 = vmatmul.bf16.gmra.mxu0 %v660
        %v706 = vpop.f32.mrf.mxu0
        %v707 = vadd.f32 0.0, %v706
        %v708 = vpop.f32.mrf.mxu0
        %709 = vdwg.mxu0
        %v710 = vadd.f32 %v633, %v681
        %v711 = vadd.f32 %v634, %v694
        %v712 = vadd.f32 %v635, %v707
        %s713 = scalar_lea.vmem %s1, 28
        %v714 = vld [vmem:[%s713] sm:$0xf]
        %715 = vst [vmem:[#allocation1] ss:$4 sm:$0xff] %v197
        %v716 = vld.sshfl [vmem:[#allocation1] sm:$0xff pattern:$0x73625140]
        %v718 = vld.sshfl [vmem:[#allocation1 + $0x8] sm:$0xff pattern:$0x73625140]
        %v720 = vld.sshfl [vmem:[#allocation1 + $0x10] sm:$0xff pattern:$0x73625140]
        %v722 = vld.sshfl [vmem:[#allocation1 + $0x18] sm:$0xff pattern:$0x73625140]
        %724 = vrot.lane.b32.xlu0 %v716, 91
        %v725 = vpop.permute.xlu0 %724
        %726 = vrot.lane.b32.xlu0 %v718, 91
        %v727 = vpop.permute.xlu0 %726
        %728 = vrot.lane.b32.xlu0 %v720, 91
        %v729 = vpop.permute.xlu0 %728
        %730 = vrot.lane.b32.xlu0 %v722, 91
        %v731 = vpop.permute.xlu0 %730
        %vm732 = vcmask 744448
        %v733 = vsel %vm732, %v725, %v727
        %v734 = vsel %vm732, %v727, %v729
        %v735 = vsel %vm732, %v729, %v731
        %v737 = vsel %vm223, %v714, 0
        %v740 = vsel %vm227, %v733, 0
        %v743 = vsel %vm227, %v734, 0
        %v746 = vsel %vm227, %v735, 0
        %748 = vmatpush.bf16.msra.mxu0 0
        %749 = vmatpush.bf16.msra.mxu0 0
        %750 = vmatpush.bf16.msra.mxu0 0
        %751 = vmatpush.bf16.msra.mxu0 0
        %752 = vmatpush.bf16.msra.mxu0 0
        %753 = vmatpush.bf16.msra.mxu0 0
        %754 = vmatpush.bf16.msra.mxu0 0
        %755 = vmatpush.bf16.msra.mxu0 %v740
        %756 = vmatmul.bf16.gmra.mxu0 %v737
        %v757 = vpop.f32.mrf.mxu0
        %v758 = vadd.f32 0.0, %v757
        %v759 = vpop.f32.mrf.mxu0
        %760 = vdwg.mxu0
        %761 = vmatpush.bf16.msra.mxu0 0
        %762 = vmatpush.bf16.msra.mxu0 0
        %763 = vmatpush.bf16.msra.mxu0 0
        %764 = vmatpush.bf16.msra.mxu0 0
        %765 = vmatpush.bf16.msra.mxu0 0
        %766 = vmatpush.bf16.msra.mxu0 0
        %767 = vmatpush.bf16.msra.mxu0 0
        %768 = vmatpush.bf16.msra.mxu0 %v743
        %769 = vmatmul.bf16.gmra.mxu0 %v737
        %v770 = vpop.f32.mrf.mxu0
        %v771 = vadd.f32 0.0, %v770
        %v772 = vpop.f32.mrf.mxu0
        %773 = vdwg.mxu0
        %774 = vmatpush.bf16.msra.mxu0 0
        %775 = vmatpush.bf16.msra.mxu0 0
        %776 = vmatpush.bf16.msra.mxu0 0
        %777 = vmatpush.bf16.msra.mxu0 0
        %778 = vmatpush.bf16.msra.mxu0 0
        %779 = vmatpush.bf16.msra.mxu0 0
        %780 = vmatpush.bf16.msra.mxu0 0
        %781 = vmatpush.bf16.msra.mxu0 %v746
        %782 = vmatmul.bf16.gmra.mxu0 %v737
        %v783 = vpop.f32.mrf.mxu0
        %v784 = vadd.f32 0.0, %v783
        %v785 = vpop.f32.mrf.mxu0
        %786 = vdwg.mxu0
        %v787 = vadd.f32 %v710, %v758
        %v788 = vadd.f32 %v711, %v771
        %v789 = vadd.f32 %v712, %v784
        %s790 = scalar_lea.vmem %s1, 32
        %v791 = vld [vmem:[%s790] sm:$0xf]
        %792 = vst [vmem:[#allocation1] ss:$4 sm:$0xff] %v197
        %v793 = vld.sshfl [vmem:[#allocation1] sm:$0xff pattern:$0x73625140]
        %v795 = vld.sshfl [vmem:[#allocation1 + $0x8] sm:$0xff pattern:$0x73625140]
        %v797 = vld.sshfl [vmem:[#allocation1 + $0x10] sm:$0xff pattern:$0x73625140]
        %v799 = vld.sshfl [vmem:[#allocation1 + $0x18] sm:$0xff pattern:$0x73625140]
        %801 = vrot.lane.b32.xlu0 %v793, 90
        %v802 = vpop.permute.xlu0 %801
        %803 = vrot.lane.b32.xlu0 %v795, 90
        %v804 = vpop.permute.xlu0 %803
        %805 = vrot.lane.b32.xlu0 %v797, 90
        %v806 = vpop.permute.xlu0 %805
        %807 = vrot.lane.b32.xlu0 %v799, 90
        %v808 = vpop.permute.xlu0 %807
        %vm809 = vcmask 736256
        %v810 = vsel %vm809, %v802, %v804
        %v811 = vsel %vm809, %v804, %v806
        %v812 = vsel %vm809, %v806, %v808
        %v814 = vsel %vm223, %v791, 0
        %v817 = vsel %vm227, %v810, 0
        %v820 = vsel %vm227, %v811, 0
        %v823 = vsel %vm227, %v812, 0
        %825 = vmatpush.bf16.msra.mxu0 0
        %826 = vmatpush.bf16.msra.mxu0 0
        %827 = vmatpush.bf16.msra.mxu0 0
        %828 = vmatpush.bf16.msra.mxu0 0
        %829 = vmatpush.bf16.msra.mxu0 0
        %830 = vmatpush.bf16.msra.mxu0 0
        %831 = vmatpush.bf16.msra.mxu0 0
        %832 = vmatpush.bf16.msra.mxu0 %v817
        %833 = vmatmul.bf16.gmra.mxu0 %v814
        %v834 = vpop.f32.mrf.mxu0
        %v835 = vadd.f32 0.0, %v834
        %v836 = vpop.f32.mrf.mxu0
        %837 = vdwg.mxu0
        %838 = vmatpush.bf16.msra.mxu0 0
        %839 = vmatpush.bf16.msra.mxu0 0
        %840 = vmatpush.bf16.msra.mxu0 0
        %841 = vmatpush.bf16.msra.mxu0 0
        %842 = vmatpush.bf16.msra.mxu0 0
        %843 = vmatpush.bf16.msra.mxu0 0
        %844 = vmatpush.bf16.msra.mxu0 0
        %845 = vmatpush.bf16.msra.mxu0 %v820
        %846 = vmatmul.bf16.gmra.mxu0 %v814
        %v847 = vpop.f32.mrf.mxu0
        %v848 = vadd.f32 0.0, %v847
        %v849 = vpop.f32.mrf.mxu0
        %850 = vdwg.mxu0
        %851 = vmatpush.bf16.msra.mxu0 0
        %852 = vmatpush.bf16.msra.mxu0 0
        %853 = vmatpush.bf16.msra.mxu0 0
        %854 = vmatpush.bf16.msra.mxu0 0
        %855 = vmatpush.bf16.msra.mxu0 0
        %856 = vmatpush.bf16.msra.mxu0 0
        %857 = vmatpush.bf16.msra.mxu0 0
        %858 = vmatpush.bf16.msra.mxu0 %v823
        %859 = vmatmul.bf16.gmra.mxu0 %v814
        %v860 = vpop.f32.mrf.mxu0
        %v861 = vadd.f32 0.0, %v860
        %v862 = vpop.f32.mrf.mxu0
        %863 = vdwg.mxu0
        %v864 = vadd.f32 %v787, %v835
        %v865 = vadd.f32 %v788, %v848
        %v866 = vadd.f32 %v789, %v861
        %v867 = vld [vmem:[%s3] sm:$0x7]
        %v869 = vperm.slane %v867, 0
        %v870 = vperm.slane %v867, 1
        %v871 = vperm.slane %v867, 2
        %v875 = vmul.f32 %v864, %v869
        %v876 = vmul.f32 %v865, %v870
        %v877 = vmul.f32 %v866, %v871
        %v878 = vadd.f32 %v875, %v876
        %v879 = vadd.f32 %v878, %v877
        %880 = vadd.xlane.f32.xlu0 %v879
        %v881 = vpop.xlane.xlu0 %880
        %v882 = vmul.f32 %v881, 0.00390625
        %v883 = vmul.f32 %v875, %v864
        %v884 = vmul.f32 %v876, %v865
        %v885 = vmul.f32 %v877, %v866
        %v886 = vadd.f32 %v883, %v884
        %v887 = vadd.f32 %v886, %v885
        %888 = vadd.xlane.f32.xlu0 %v887
        %v889 = vpop.xlane.xlu0 %888
        %v890 = vmul.f32 %v889, 0.00390625
        %v891 = vmul.f32 %v882, %v882
        %v892 = vsub.f32 %v890, %v891
        %v893 = vld [vmem:[%s2] sm:$0xff]
        %v894 = vadd.f32 %v892, 1e-05
        %v895 = vrsqrt.pop %v894
        %v896 = vmul.f32 %v895, %v894
        %v897 = vmul.f32 %v896, %v895
        %v898 = vmul.f32 0.5, %v897
        %v899 = vsub.f32 1.5, %v898
        %v900 = vmul.f32 %v895, %v899
        %vm901 = vweird.f32 %v894
        %vm902 = vweird.f32 %v895
        %vm903 = vmor %vm901, %vm902
        %v904 = vsel %vm903, %v895, %v900
        %v905 = vmul.f32 %v893, %v904
        %v906 = vmul.f32 %v882, %v905
        %908 = vrot.lane.b32.xlu0 %v906, 1
        %v909 = vpop.permute.xlu0 %908
        %v911 = vsub.f32 %v893, %v909
        %913 = vset.pattern.permute.xlu0 0
        %914 = vperm.xlu0 %913, %v905
        %v915 = vpop.permute.xlu0 %914
        %v917 = vmul.f32 %v864, %v915
        %v918 = vmul.f32 %v865, %v915
        %v919 = vmul.f32 %v866, %v915
        %921 = vset.pattern.permute.xlu0 1
        %922 = vperm.xlu0 %921, %v911
        %v923 = vpop.permute.xlu0 %922
        %v925 = vadd.f32 %v917, %v923
        %v926 = vadd.f32 %v918, %v923
        %v927 = vadd.f32 %v919, %v923
        %vm928 = vcmp.ge.f32.partialorder %v925, 0.0
        %vm929 = vcmp.ge.f32.partialorder %v926, 0.0
        %vm930 = vcmp.ge.f32.partialorder %v927, 0.0
        %v931 = vmul.f32 %v925, 0.2
        %v932 = vmul.f32 %v926, 0.2
        %v933 = vmul.f32 %v927, 0.2
        %v934 = vsel %vm928, %v925, %v931
        %v935 = vsel %vm929, %v926, %v932
        %v936 = vsel %vm930, %v927, %v933
        %937 = vst [vmem:[%s190] sm:$0xff] %v934
        %938 = vst [vmem:[%s190 + $0x8] sm:$0xff] %v935
        %939 = vst [vmem:[%s190 + $0x10] sm:$0xff] %v936
        %s940 = sand.u32 %s115, 1
        %s941 = scalar_lea.sflag [#allocation3], %s940
        %s942 = sand.u32 %s115, 1
        %s943 = smul.addr %s942, 24
        %s944 = scalar_lea.vmem [#allocation2], %s943
        // Predicated region
        $region37: #{tpu_custom_call.1} parent=35 // pred_check
          %p945 = pneg %p125
        $region38: #{tpu_custom_call.1} parent=35 // pred_check_branch
          %947 = sbr.rel (%p945) target = $region40
        $region39: #{tpu_custom_call.1} parent=35 // pred_region
          %949 = vsyncadd %s941, 0
          %s950 = smul.addr %s18, 3
          %s951 = smul.addr %s950, 8
          %s952 = scalar_lea.hbm %s4, %s951
          %s954 = sshll.u32 %s944, 4
          %s955 = int_to_ptr.vmem [resolvable:$true] %s954
          %s956 = sshll.u32 %s952, 4
          %s957 = int_to_ptr.hbm [resolvable:$true] %s956
          %959 = dma.vmem_to_hbm [thread:$0]  %s955, 384, %s957, %s941
        $region40: #{tpu_custom_call.1} parent=35 // pred_fallthru
          _
      $region36: #{tpu_custom_call.1} parent=5 // pred_fallthru
        _
      %p960 = scmp.le.s32.totalorder 2, %s13
      // Predicated region
      $region41: #{tpu_custom_call.1} parent=5 // pred_check
        %p961 = pneg %p960
      $region42: #{tpu_custom_call.1} parent=5 // pred_check_branch
        %963 = sbr.rel (%p961) target = $region44
      $region43: #{tpu_custom_call.1} parent=5 // pred_region
        %s964 = ssub.s32 %s13, 2
        // Predicated region
        $region45: #{tpu_custom_call.1} parent=43 // pred_check
          %p965 = pneg %p131
        $region46: #{tpu_custom_call.1} parent=43 // pred_check_branch
          %967 = sbr.rel (%p965) target = $region48
        $region47: #{tpu_custom_call.1} parent=43 // pred_region
          %s968 = sand.u32 %s116, 1
          %s969 = scalar_lea.sflag [#allocation3], %s968
          %s970 = sand.u32 %s116, 1
          %s971 = smul.addr %s970, 24
          %s972 = scalar_lea.vmem [#allocation2], %s971
          %974 = dma.done %s969, 384
        $region48: #{tpu_custom_call.1} parent=43 // pred_fallthru
          _
      $region44: #{tpu_custom_call.1} parent=5 // pred_fallthru
        _
    $region6: #{tpu_custom_call.1} parent=1 // loop_footer
      %s17 = sadd.s32 1, %s13
    $region7: #{tpu_custom_call.1} parent=1 // loop_footer_branch
      %12 = sbr.rel target = $region3
    $region8: #{tpu_custom_call.1} parent=1 // loop_exit
      _
    %975 = vsyncpa [#allocation3], 1
    %s976 = scalar_lea.sflag [#allocation3], 1
    %977 = vsyncpa %s976, 1

</llo_original>
